<compile_context>
chip_gen: v7x
topology: tpu7x:2x2x1
jax: 0.10.0
libtpu: 0.0.40
codegen_flags: <defaults>
</compile_context>

<pallas_src>
import jax
import jax.numpy as jnp
from jax.experimental import pallas as pl
from jax.experimental.pallas import tpu as pltpu


# ----------------------------------------------------------------------------
# Kernel
# ----------------------------------------------------------------------------
def double_q_kernel(state_ref, action_ref,
                    w1_ref, b1_ref,
                    w2_ref, b2_ref,
                    w3t_ref, b3_ref,
                    out_ref):
    s = state_ref[...]
    a = action_ref[...]
    if s.dtype != jnp.bfloat16:
        s = s.astype(jnp.bfloat16)
    if a.dtype != jnp.bfloat16:
        a = a.astype(jnp.bfloat16)

    # In-kernel concat along the lane axis (cheap; hides under MXU slack).
    sa = jnp.concatenate([s, a], axis=1)                 # (TB, Din)

    # Fused layer 1 (both heads, single matmul): (TB, 2H1)
    h = jnp.dot(sa, w1_ref[...], preferred_element_type=jnp.float32) + b1_ref[...]
    h = jnp.maximum(h, 0.0)

    # Fused layer 2 (block-diagonal W2): (TB, 2H2)
    h = jnp.dot(h.astype(jnp.bfloat16), w2_ref[...],
                preferred_element_type=jnp.float32) + b2_ref[...]
    h = jnp.maximum(h, 0.0)

    # Fused layer 3, emitted transposed so the output slab is lane-dense:
    # qt[n, m] = sum_k W3t[n, k] * h[m, k]   ->   shape (2, TB)
    qt = jax.lax.dot_general(
        w3t_ref[...], h.astype(jnp.bfloat16),
        (((1,), (1,)), ((), ())),
        preferred_element_type=jnp.float32)
    out_ref[...] = qt + b3_ref[...]          # b3 is (2, 1): broadcast over lanes


# ----------------------------------------------------------------------------
# Parameters
# ----------------------------------------------------------------------------
def init_params(key, state_dim, action_dim, hid_shape):
    """Per-head unfused params: [[(W1,b1),(W2,b2),(W3,b3)] for each head],
    W of shape (in, out), b of shape (1, out).  Init matches torch.nn.Linear
    default (uniform +-1/sqrt(fan_in))."""
    layers = [state_dim + action_dim] + list(hid_shape) + [1]
    heads = []
    for _ in range(2):
        head = []
        for j in range(len(layers) - 1):
            key, kw, kb = jax.random.split(key, 3)
            bound = 1.0 / (layers[j] ** 0.5)
            w = jax.random.uniform(kw, (layers[j], layers[j + 1]),
                                   jnp.float32, -bound, bound)
            b = jax.random.uniform(kb, (1, layers[j + 1]),
                                   jnp.float32, -bound, bound)
            head.append((w, b))
        heads.append(head)
    return heads


def pack_params(heads):
    """Fuse the two heads into one set of kernel weights (bf16) + biases (f32)."""
    (w1_1, b1_1), (w2_1, b2_1), (w3_1, b3_1) = heads[0]
    (w1_2, b1_2), (w2_2, b2_2), (w3_2, b3_2) = heads[1]

    def bdiag(a, b):
        z_ab = jnp.zeros((a.shape[0], b.shape[1]), jnp.float32)
        z_ba = jnp.zeros((b.shape[0], a.shape[1]), jnp.float32)
        return jnp.concatenate(
            [jnp.concatenate([a, z_ab], axis=1),
             jnp.concatenate([z_ba, b], axis=1)], axis=0)

    # Single fused W1: (state_dim+action_dim, 2*H1)
    w1 = jnp.concatenate([w1_1, w1_2], axis=1)
    b1 = jnp.concatenate([b1_1, b1_2], axis=1)
    w2 = bdiag(w2_1, w2_2)                      # (2*H1, 2*H2) block-diagonal
    b2 = jnp.concatenate([b2_1, b2_2], axis=1)
    w3t = bdiag(w3_1.T, w3_2.T)                 # (2, 2*H2) block-diag (transposed)
    b3 = jnp.concatenate([b3_1, b3_2], axis=0)  # (2, 1)

    bf16 = jnp.bfloat16
    return (w1.astype(bf16), b1.astype(jnp.float32),
            w2.astype(bf16), b2.astype(jnp.float32),
            w3t.astype(bf16), b3.astype(jnp.float32))


# ----------------------------------------------------------------------------
# Wrapper
# ----------------------------------------------------------------------------
def _round_up(x, m):
    return ((x + m - 1) // m) * m


def _tpu_num_tensorcores():
    """2 TensorCores/chip on v7x, 1 on v5e/v6e.  Best-effort detection."""
    try:
        kind = jax.devices()[0].device_kind.lower()
        if any(tag in kind for tag in ("v7", "tpu7", "7x")):
            return 2
    except Exception:
        pass
    return 1


def _pick_batch_tile(B, block_b, num_cores):
    """Largest tile that (a) fits block_b, (b) gives >=num_cores grid steps
    on multi-TC chips, (c) keeps the lane-dense (2, TB) output block legal
    (TB a multiple of 128 unless TB == B)."""
    if num_cores <= 1:
        return min(B, block_b) if B <= block_b else block_b
    tb = min(block_b, _round_up(pl.cdiv(B, num_cores), 128))
    if tb >= B:          # batch too small to split usefully -> single block
        return min(B, block_b)
    return tb


def double_q_critic_forward(state, action, packed, *, block_b=2048,
                            num_cores=None):
    # Accept bf16 (or f32) state/action directly — no forced f32 upcast.
    B, _ = state.shape
    state_dim = state.shape[1]
    action_dim = action.shape[1]
    w1, b1, w2, b2, w3t, b3 = packed
    din, two_h1 = w1.shape
    two_h2 = w2.shape[1]
    two = b3.shape[0]                  # = 2 (both Q heads)

    if num_cores is None:
        num_cores = _tpu_num_tensorcores()
    tb = _pick_batch_tile(B, block_b, num_cores)
    grid = (pl.cdiv(B, tb),)

    in_specs = [
        pl.BlockSpec((tb, state_dim), lambda i: (i, 0)),
        pl.BlockSpec((tb, action_dim), lambda i: (i, 0)),
    ] + [pl.BlockSpec(p.shape, lambda i: (0, 0)) for p in packed]

    # Advisory cost estimate so XLA can overlap this few-us call with
    # surrounding graph ops (target nets, loss math, ...).
    flops = 2 * B * (din * two_h1 + two_h1 * two_h2 + two_h2 * two)
    bytes_accessed = int(
        state.size * state.dtype.itemsize
        + action.size * action.dtype.itemsize
        + sum(int(p.size) * p.dtype.itemsize for p in packed)
        + two * B * 4)
    cost = pl.CostEstimate(flops=flops, transcendentals=0,
                           bytes_accessed=bytes_accessed)

    qt = pl.pallas_call(
        double_q_kernel,
        grid=grid,
        in_specs=in_specs,
        out_specs=pl.BlockSpec((two, tb), lambda i: (0, i)),
        out_shape=jax.ShapeDtypeStruct((two, B), jnp.float32),
        compiler_params=pltpu.CompilerParams(
            dimension_semantics=("parallel",)),
        cost_estimate=cost,
    )(state, action, *packed)

    # Slice the lane-dense (2, B) slab back into two (B, 1) Q values.
    return qt[0, :, None], qt[1, :, None]


# ----------------------------------------------------------------------------
# References
# ----------------------------------------------------------------------------
def reference_forward_exact(state, action, heads):
    """Pure-f32, unfused forward — exact PyTorch Double_Q_Critic semantics."""
    sa = jnp.concatenate([state, action], axis=1).astype(jnp.float32)

    def q(head):
        (w1, b1), (w2, b2), (w3, b3) = head
        h = jnp.maximum(sa @ w1 + b1, 0.0)
        h = jnp.maximum(h @ w2 + b2, 0.0)
        return h @ w3 + b3

    return q(heads[0]), q(heads[1])


def reference_forward_packed(state, action, packed):
    """Pure-JAX mirror of the kernel math (fused heads, bf16 ops, f32 acc)."""
    w1, b1, w2, b2, w3t, b3 = packed
    sa = jnp.concatenate([state.astype(jnp.bfloat16),
                          action.astype(jnp.bfloat16)], axis=1)
    h = jnp.dot(sa, w1, preferred_element_type=jnp.float32) + b1
    h = jnp.maximum(h, 0.0)
    h = jnp.dot(h.astype(jnp.bfloat16), w2,
                preferred_element_type=jnp.float32) + b2
    h = jnp.maximum(h, 0.0)
    qt = jax.lax.dot_general(w3t, h.astype(jnp.bfloat16),
                             (((1,), (1,)), ((), ())),
                             preferred_element_type=jnp.float32) + b3
    return qt[0, :, None], qt[1, :, None]


# ----------------------------------------------------------------------------
# Demo / self-test
# ----------------------------------------------------------------------------
if __name__ == "__main__":
    batch = 32
    state_dim = 16
    action_dim = 8
    hid_shape = (64, 64)         # fused hidden width = 128 (one full lane width)

    key = jax.random.PRNGKey(0)
    k_state, k_action, k_params = jax.random.split(key, 3)

    state = jax.random.normal(k_state, (batch, state_dim), jnp.float32)
    action = jax.random.normal(k_action, (batch, action_dim), jnp.float32)

    heads = init_params(k_params, state_dim, action_dim, hid_shape)
    packed = pack_params(heads)

    # f32 inputs (casts to bf16 inside the kernel).
    q1, q2 = double_q_critic_forward(state, action, packed)
    jax.block_until_ready((q1, q2))
    assert q1.shape == (batch, 1) and q2.shape == (batch, 1)

    # Tight check vs a pure-JAX mirror of the kernel math (same bf16/f32 mix).
    r1, r2 = reference_forward_packed(state, action, packed)
    assert jnp.allclose(q1, r1, atol=1e-3), "q1 mismatch vs packed reference"
    assert jnp.allclose(q2, r2, atol=1e-3), "q2 mismatch vs packed reference"

    # Semantics check vs exact f32 PyTorch-equivalent forward (bf16 weights ->
    # loosened tolerance; deliberate precision trade for SAC critics).
    e1, e2 = reference_forward_exact(state, action, heads)
    assert jnp.allclose(q1, e1, atol=1e-1), "q1 mismatch vs exact f32 reference"
    assert jnp.allclose(q2, e2, atol=1e-1), "q2 mismatch vs exact f32 reference"

    # bf16-input fast path (no wrapper upcast, no in-kernel cast).
    qb1, qb2 = double_q_critic_forward(state.astype(jnp.bfloat16),
                                       action.astype(jnp.bfloat16), packed)
    jax.block_until_ready((qb1, qb2))
    assert qb1.shape == (batch, 1) and qb2.shape == (batch, 1)
    assert bool(jnp.all(jnp.isfinite(qb1))) and bool(jnp.all(jnp.isfinite(qb2)))

    print("KERNEL_OK")
</pallas_src>

<mosaic_0001>
module attributes {stable_mosaic.version = 11 : i64} {
  func.func @double_q_kernel(%arg0: i32, %arg1: memref<32x16xf32, #tpu.memory_space<vmem>>, %arg2: memref<32x8xf32, #tpu.memory_space<vmem>>, %arg3: memref<24x128xbf16, #tpu.memory_space<vmem>>, %arg4: memref<1x128xf32, #tpu.memory_space<vmem>>, %arg5: memref<128x128xbf16, #tpu.memory_space<vmem>>, %arg6: memref<1x128xf32, #tpu.memory_space<vmem>>, %arg7: memref<2x128xbf16, #tpu.memory_space<vmem>>, %arg8: memref<2x1xf32, #tpu.memory_space<vmem>>, %arg9: memref<2x32xf32, #tpu.memory_space<vmem>>) attributes {dimension_semantics = [#tpu.dimension_semantics<parallel>], iteration_bounds = array<i64: 1>, scalar_prefetch = 0 : i64, scratch_operands = 0 : i64, tpu.core_type = #tpu.core_type<tc>, window_params = [{transform_indices = @transform_0, window_bounds = array<i64: 32, 16>}, {transform_indices = @transform_1, window_bounds = array<i64: 32, 8>}, {pipeline_mode = #tpu.pipeline_mode<synchronous>, transform_indices = @transform_2, window_bounds = array<i64: 24, 128>}, {pipeline_mode = #tpu.pipeline_mode<synchronous>, transform_indices = @transform_3, window_bounds = array<i64: 1, 128>}, {pipeline_mode = #tpu.pipeline_mode<synchronous>, transform_indices = @transform_4, window_bounds = array<i64: 128, 128>}, {pipeline_mode = #tpu.pipeline_mode<synchronous>, transform_indices = @transform_5, window_bounds = array<i64: 1, 128>}, {pipeline_mode = #tpu.pipeline_mode<synchronous>, transform_indices = @transform_6, window_bounds = array<i64: 2, 128>}, {pipeline_mode = #tpu.pipeline_mode<synchronous>, transform_indices = @transform_7, window_bounds = array<i64: 2, 1>}, {transform_indices = @transform_8, window_bounds = array<i64: 2, 32>}]} {
    %c0 = arith.constant 0 : index
    %c0_0 = arith.constant 0 : index
    %0 = vector.load %arg1[%c0, %c0_0] : memref<32x16xf32, #tpu.memory_space<vmem>>, vector<32x16xf32>
    %c0_1 = arith.constant 0 : index
    %c0_2 = arith.constant 0 : index
    %1 = vector.load %arg2[%c0_1, %c0_2] : memref<32x8xf32, #tpu.memory_space<vmem>>, vector<32x8xf32>
    %2 = arith.truncf %0 : vector<32x16xf32> to vector<32x16xbf16>
    %3 = arith.truncf %1 : vector<32x8xf32> to vector<32x8xbf16>
    %4 = tpu.concatenate %2, %3 in 1 : vector<32x16xbf16>, vector<32x8xbf16> -> vector<32x24xbf16>
    %c0_3 = arith.constant 0 : index
    %c0_4 = arith.constant 0 : index
    %5 = vector.load %arg3[%c0_3, %c0_4] : memref<24x128xbf16, #tpu.memory_space<vmem>>, vector<24x128xbf16>
    %cst = arith.constant dense<0.000000e+00> : vector<32x128xf32>
    %6 = tpu.matmul %4, %5, %cst {dimension_numbers = #tpu.dot_dimension_numbers<[1], [0], [0], [1], [0, 0, 1, 1], [], []>} : vector<32x24xbf16>, vector<24x128xbf16>, vector<32x128xf32> -> vector<32x128xf32>
    %c0_5 = arith.constant 0 : index
    %c0_6 = arith.constant 0 : index
    %7 = vector.load %arg4[%c0_5, %c0_6] : memref<1x128xf32, #tpu.memory_space<vmem>>, vector<1x128xf32>
    %8 = vector.broadcast %7 : vector<1x128xf32> to vector<32x128xf32>
    %9 = arith.addf %6, %8 : vector<32x128xf32>
    %cst_7 = arith.constant 0.000000e+00 : f32
    %10 = vector.broadcast %cst_7 : f32 to vector<32x128xf32>
    %11 = arith.maximumf %9, %10 : vector<32x128xf32>
    %12 = arith.truncf %11 : vector<32x128xf32> to vector<32x128xbf16>
    %c0_8 = arith.constant 0 : index
    %c0_9 = arith.constant 0 : index
    %13 = vector.load %arg5[%c0_8, %c0_9] : memref<128x128xbf16, #tpu.memory_space<vmem>>, vector<128x128xbf16>
    %cst_10 = arith.constant dense<0.000000e+00> : vector<32x128xf32>
    %14 = tpu.matmul %12, %13, %cst_10 {dimension_numbers = #tpu.dot_dimension_numbers<[1], [0], [0], [1], [0, 0, 1, 1], [], []>} : vector<32x128xbf16>, vector<128x128xbf16>, vector<32x128xf32> -> vector<32x128xf32>
    %c0_11 = arith.constant 0 : index
    %c0_12 = arith.constant 0 : index
    %15 = vector.load %arg6[%c0_11, %c0_12] : memref<1x128xf32, #tpu.memory_space<vmem>>, vector<1x128xf32>
    %16 = vector.broadcast %15 : vector<1x128xf32> to vector<32x128xf32>
    %17 = arith.addf %14, %16 : vector<32x128xf32>
    %cst_13 = arith.constant 0.000000e+00 : f32
    %18 = vector.broadcast %cst_13 : f32 to vector<32x128xf32>
    %19 = arith.maximumf %17, %18 : vector<32x128xf32>
    %c0_14 = arith.constant 0 : index
    %c0_15 = arith.constant 0 : index
    %20 = vector.load %arg7[%c0_14, %c0_15] : memref<2x128xbf16, #tpu.memory_space<vmem>>, vector<2x128xbf16>
    %21 = arith.truncf %19 : vector<32x128xf32> to vector<32x128xbf16>
    %cst_16 = arith.constant dense<0.000000e+00> : vector<2x32xf32>
    %22 = tpu.matmul %20, %21, %cst_16 {dimension_numbers = #tpu.dot_dimension_numbers<[1], [1], [0], [0], [0, 0, 1, 0], [], []>} : vector<2x128xbf16>, vector<32x128xbf16>, vector<2x32xf32> -> vector<2x32xf32>
    %c0_17 = arith.constant 0 : index
    %c0_18 = arith.constant 0 : index
    %23 = vector.load %arg8[%c0_17, %c0_18] : memref<2x1xf32, #tpu.memory_space<vmem>>, vector<2x1xf32>
    %24 = vector.broadcast %23 : vector<2x1xf32> to vector<2x32xf32>
    %25 = arith.addf %22, %24 : vector<2x32xf32>
    %c0_19 = arith.constant 0 : index
    %c0_20 = arith.constant 0 : index
    %26 = vector.load %arg9[%c0_19, %c0_20] : memref<2x32xf32, #tpu.memory_space<vmem>>, vector<2x32xf32>
    tpu.vector_store %arg9[%c0_19, %c0_20], %25 {strides = array<i32>} : memref<2x32xf32, #tpu.memory_space<vmem>>, vector<2x32xf32>,
    return
  }
  func.func @transform_0(%arg0: i32) -> (i32, i32) {
    %c0_i32 = arith.constant 0 : i32
    %c0_i32_0 = arith.constant 0 : i32
    return %arg0, %c0_i32 : i32, i32
  }
  func.func @transform_1(%arg0: i32) -> (i32, i32) {
    %c0_i32 = arith.constant 0 : i32
    %c0_i32_0 = arith.constant 0 : i32
    return %arg0, %c0_i32 : i32, i32
  }
  func.func @transform_2(%arg0: i32) -> (i32, i32) {
    %c0_i32 = arith.constant 0 : i32
    %c0_i32_0 = arith.constant 0 : i32
    %c0_i32_1 = arith.constant 0 : i32
    return %c0_i32, %c0_i32_0 : i32, i32
  }
  func.func @transform_3(%arg0: i32) -> (i32, i32) {
    %c0_i32 = arith.constant 0 : i32
    %c0_i32_0 = arith.constant 0 : i32
    %c0_i32_1 = arith.constant 0 : i32
    return %c0_i32, %c0_i32_0 : i32, i32
  }
  func.func @transform_4(%arg0: i32) -> (i32, i32) {
    %c0_i32 = arith.constant 0 : i32
    %c0_i32_0 = arith.constant 0 : i32
    %c0_i32_1 = arith.constant 0 : i32
    return %c0_i32, %c0_i32_0 : i32, i32
  }
  func.func @transform_5(%arg0: i32) -> (i32, i32) {
    %c0_i32 = arith.constant 0 : i32
    %c0_i32_0 = arith.constant 0 : i32
    %c0_i32_1 = arith.constant 0 : i32
    return %c0_i32, %c0_i32_0 : i32, i32
  }
  func.func @transform_6(%arg0: i32) -> (i32, i32) {
    %c0_i32 = arith.constant 0 : i32
    %c0_i32_0 = arith.constant 0 : i32
    %c0_i32_1 = arith.constant 0 : i32
    return %c0_i32, %c0_i32_0 : i32, i32
  }
  func.func @transform_7(%arg0: i32) -> (i32, i32) {
    %c0_i32 = arith.constant 0 : i32
    %c0_i32_0 = arith.constant 0 : i32
    %c0_i32_1 = arith.constant 0 : i32
    return %c0_i32, %c0_i32_0 : i32, i32
  }
  func.func @transform_8(%arg0: i32) -> (i32, i32) {
    %c0_i32 = arith.constant 0 : i32
    %c0_i32_0 = arith.constant 0 : i32
    return %c0_i32, %arg0 : i32, i32
  }
}

</mosaic_0001>

<llo_original>
// kernel: tpu_custom_call.1
$region0: #{tpu_custom_call.1}
  #allocation0 [shape = 'u32[]', space=smem, size = 0x4, offset = 0x4, fixed_abs, tag = 'smem constant byte address 0x4 - core index']
  #allocation1 [shape = 'u32[144,128]{1,0:T(1,128)}', space=vmem, size = 0x12000, scoped, tag = 'internal scratch']
  %s0 = inlined_call_operand.vmem [shape: f32[32,16], index: 0, kind: input, shape index: {}]
  %s1 = inlined_call_operand.vmem [shape: f32[32,8], index: 1, kind: input, shape index: {}]
  %s2 = inlined_call_operand.vmem [shape: bf16[24,128], index: 2, kind: input, shape index: {}]
  %s3 = inlined_call_operand.vmem [shape: f32[1,128], index: 3, kind: input, shape index: {}]
  %s4 = inlined_call_operand.vmem [shape: bf16[128,128], index: 4, kind: input, shape index: {}]
  %s5 = inlined_call_operand.vmem [shape: f32[1,128], index: 5, kind: input, shape index: {}]
  %s6 = inlined_call_operand.vmem [shape: bf16[2,128], index: 6, kind: input, shape index: {}]
  %s7 = inlined_call_operand.vmem [shape: f32[2,1], index: 7, kind: input, shape index: {}]
  %s8 = inlined_call_operand.hbm [shape: f32[2,32], index: 8, kind: output, shape index: {}]
  %s9 = sld [smem:[#allocation0]]
  $region42: #{tpu_custom_call.1} parent=0
    _
  %s11 = ssub.s32 1, %s9
  %s12 = scalar_select 0, %s11, %s9
  $region1: #{tpu_custom_call.1} parent=0
    #allocation2 [shape = 'u8[1024]{0}', space=vmem, size = 0x400, scoped, tag = 'output window, operand 0, single buffered']
    #allocation3 [shape = 's32[1]{0}', space=sflag, size = 0x4, scoped, tag = 'scoped memory for tpu_custom_call.1']
    %13 = vsyncpa [#allocation3], 0
    // Predicated region
    $region2: #{tpu_custom_call.1} parent=1 // pred_check
      _
    $region3: #{tpu_custom_call.1} parent=1 // pred_check_branch
      %15 = sbr.rel (0) target = $region5
    $region4: #{tpu_custom_call.1} parent=1 // pred_region
      _
    $region5: #{tpu_custom_call.1} parent=1 // pred_fallthru
      _
    // Predicated region
    $region6: #{tpu_custom_call.1} parent=1 // pred_check
      _
    $region7: #{tpu_custom_call.1} parent=1 // pred_check_branch
      %17 = sbr.rel (0) target = $region9
    $region8: #{tpu_custom_call.1} parent=1 // pred_region
      _
    $region9: #{tpu_custom_call.1} parent=1 // pred_fallthru
      _
    // Predicated region
    $region10: #{tpu_custom_call.1} parent=1 // pred_check
      _
    $region11: #{tpu_custom_call.1} parent=1 // pred_check_branch
      %19 = sbr.rel (0) target = $region13
    $region12: #{tpu_custom_call.1} parent=1 // pred_region
      _
    $region13: #{tpu_custom_call.1} parent=1 // pred_fallthru
      _
    // Predicated region
    $region14: #{tpu_custom_call.1} parent=1 // pred_check
      _
    $region15: #{tpu_custom_call.1} parent=1 // pred_check_branch
      %21 = sbr.rel (0) target = $region17
    $region16: #{tpu_custom_call.1} parent=1 // pred_region
      _
    $region17: #{tpu_custom_call.1} parent=1 // pred_fallthru
      _
    // Predicated region
    $region18: #{tpu_custom_call.1} parent=1 // pred_check
      _
    $region19: #{tpu_custom_call.1} parent=1 // pred_check_branch
      %23 = sbr.rel (0) target = $region21
    $region20: #{tpu_custom_call.1} parent=1 // pred_region
      _
    $region21: #{tpu_custom_call.1} parent=1 // pred_fallthru
      _
    // Predicated region
    $region22: #{tpu_custom_call.1} parent=1 // pred_check
      _
    $region23: #{tpu_custom_call.1} parent=1 // pred_check_branch
      %25 = sbr.rel (0) target = $region25
    $region24: #{tpu_custom_call.1} parent=1 // pred_region
      _
    $region25: #{tpu_custom_call.1} parent=1 // pred_fallthru
      _
    // Predicated region
    $region26: #{tpu_custom_call.1} parent=1 // pred_check
      _
    $region27: #{tpu_custom_call.1} parent=1 // pred_check_branch
      %27 = sbr.rel (0) target = $region29
    $region28: #{tpu_custom_call.1} parent=1 // pred_region
      _
    $region29: #{tpu_custom_call.1} parent=1 // pred_fallthru
      _
    // Predicated region
    $region30: #{tpu_custom_call.1} parent=1 // pred_check
      _
    $region31: #{tpu_custom_call.1} parent=1 // pred_check_branch
      %29 = sbr.rel (0) target = $region33
    $region32: #{tpu_custom_call.1} parent=1 // pred_region
      _
    $region33: #{tpu_custom_call.1} parent=1 // pred_fallthru
      _
    %v31 = vld [vmem:[%s0] sm:$0xff]
    %v32 = vld [vmem:[%s0 + $0x8] sm:$0xff]
    %v33 = vld [vmem:[%s0 + $0x10] sm:$0xff]
    %v34 = vld [vmem:[%s0 + $0x18] sm:$0xff]
    %v35 = vld [vmem:[%s1] sm:$0xff]
    %v36 = vld [vmem:[%s1 + $0x8] sm:$0xff]
    %v37 = vld [vmem:[%s1 + $0x10] sm:$0xff]
    %v38 = vld [vmem:[%s1 + $0x18] sm:$0xff]
    %v39 = vpack.c.bf16 %v32, %v31
    %v40 = vpack.c.bf16 %v34, %v33
    %v41 = vpack.c.bf16 %v36, %v35
    %v42 = vpack.c.bf16 %v38, %v37
    %45 = vrot.lane.b32.xlu0 %v41, 16
    %v46 = vpop.permute.xlu0 %45
    %47 = vrot.lane.b32.xlu0 %v42, 16
    %v48 = vpop.permute.xlu0 %47
    %vm49 = vcmask 130048
    %v52 = vsel %vm49, %v39, %v46
    %v55 = vsel %vm49, %v40, %v48
    %v56 = vld [vmem:[%s2] sm:$0xf]
    %v57 = vld [vmem:[%s2 + $0x4] sm:$0xf]
    %v58 = vld [vmem:[%s2 + $0x8] sm:$0xf]
    %v59 = vld [vmem:[%s3] sm:$0x1]
    %v61 = vlaneseq
    %v62 = vshrl.u32 %v61, 7
    %v63 = vsub.s32 0, %v62
    %v64 = vrot.slane %v59, %v63
    %v69 = vunpack.c.l.b16 %v56
    %v70 = vunpack.c.l.b16 %v57
    %v71 = vunpack.c.l.b16 %v58
    %v72 = vpack.c.b16 %v70, %v69
    %v73 = vpack.c.b16 %v71, %v71
    %vm75 = vcmask 195584
    %v76 = vsel %vm75, %v52, 0
    %v78 = vsel %vm75, %v55, 0
    %vm80 = vcmask 1043456
    %v82 = vsel %vm80, %v73, 0
    %84 = vmatprep.subr.bf16.mxu0 0
    %85 = vmatpush1.bf16.msra.mxu0 %v72
    %86 = vmatprep.subr.bf16.mxu0 0
    %87 = vmatpush1.bf16.msra.mxu0 %v82
    %88 = vmatprep.subr.bf16.mxu0 0
    %89 = vmatpush1.bf16.msra.mxu0 0
    %90 = vmatprep.subr.bf16.mxu0 0
    %91 = vmatpush1.bf16.msra.mxu0 0
    %92 = vmatprep.subr.bf16.mxu0 0
    %93 = vmatpush1.bf16.msra.mxu0 0
    %94 = vmatprep.subr.bf16.mxu0 0
    %95 = vmatpush1.bf16.msra.mxu0 0
    %96 = vmatprep.subr.bf16.mxu0 0
    %97 = vmatpush1.bf16.msra.mxu0 0
    %98 = vmatprep.subr.bf16.mxu0 0
    %99 = vmatpush1.bf16.msra.mxu0 0
    %100 = vmatprep.subr.bf16.mxu0 0
    %101 = vmatpush1.bf16.msra.mxu0 0
    %102 = vmatprep.subr.bf16.mxu0 0
    %103 = vmatpush1.bf16.msra.mxu0 0
    %104 = vmatprep.subr.bf16.mxu0 0
    %105 = vmatpush1.bf16.msra.mxu0 0
    %106 = vmatprep.subr.bf16.mxu0 0
    %107 = vmatpush1.bf16.msra.mxu0 0
    %108 = vmatprep.subr.bf16.mxu0 0
    %109 = vmatpush1.bf16.msra.mxu0 0
    %110 = vmatprep.subr.bf16.mxu0 0
    %111 = vmatpush1.bf16.msra.mxu0 0
    %112 = vmatprep.subr.bf16.mxu0 0
    %113 = vmatpush1.bf16.msra.mxu0 0
    %114 = vmatprep.subr.bf16.mxu0 0
    %115 = vmatpush1.bf16.msra.mxu0 0
    %116 = vmatprep.mubr.bf16.mxu0 0
    %117 = vmatmul.mubr.bf16.gmra.mrb[0].mxu0 %v76
    %v118 = vpop.f32.mrb[0].mxu0
    %v119 = vadd.f32 %v64, %v118
    %v120 = vpop.f32.mrb[0].mxu0
    %v121 = vpop.f32.mrb[0].mxu0
    %v122 = vadd.f32 %v64, %v121
    %v123 = vpop.f32.mrb[0].mxu0
    %124 = vmatprep.mubr.bf16.mxu0 0
    %125 = vmatmul.mubr.bf16.gmra.mrb[0].mxu0 %v78
    %v126 = vpop.f32.mrb[0].mxu0
    %v127 = vadd.f32 %v64, %v126
    %v128 = vpop.f32.mrb[0].mxu0
    %v129 = vpop.f32.mrb[0].mxu0
    %v130 = vadd.f32 %v64, %v129
    %v131 = vpop.f32.mrb[0].mxu0
    %132 = vdwg.mxu0
    %v133 = vmax.f32 %v119, 0.0
    %v134 = vmax.f32 %v122, 0.0
    %v135 = vmax.f32 %v127, 0.0
    %v136 = vmax.f32 %v130, 0.0
    %v137 = vpack.c.bf16 %v134, %v133
    %v138 = vpack.c.bf16 %v136, %v135
    %v139 = vld [vmem:[%s4] sm:$0xf]
    %v140 = vld [vmem:[%s4 + $0x4] sm:$0xf]
    %v141 = vld [vmem:[%s4 + $0x8] sm:$0xf]
    %v142 = vld [vmem:[%s4 + $0xc] sm:$0xf]
    %v143 = vld [vmem:[%s4 + $0x10] sm:$0xf]
    %v144 = vld [vmem:[%s4 + $0x14] sm:$0xf]
    %v145 = vld [vmem:[%s4 + $0x18] sm:$0xf]
    %v146 = vld [vmem:[%s4 + $0x1c] sm:$0xf]
    %v147 = vld [vmem:[%s4 + $0x20] sm:$0xf]
    %v148 = vld [vmem:[%s4 + $0x24] sm:$0xf]
    %v149 = vld [vmem:[%s4 + $0x28] sm:$0xf]
    %v150 = vld [vmem:[%s4 + $0x2c] sm:$0xf]
    %v151 = vld [vmem:[%s4 + $0x30] sm:$0xf]
    %v152 = vld [vmem:[%s4 + $0x34] sm:$0xf]
    %v153 = vld [vmem:[%s4 + $0x38] sm:$0xf]
    %v154 = vld [vmem:[%s4 + $0x3c] sm:$0xf]
    %v155 = vld [vmem:[%s5] sm:$0x1]
    %v157 = vlaneseq
    %v158 = vshrl.u32 %v157, 7
    %v159 = vsub.s32 0, %v158
    %v160 = vrot.slane %v155, %v159
    %v178 = vunpack.c.l.b16 %v139
    %v179 = vunpack.c.l.b16 %v140
    %v180 = vunpack.c.l.b16 %v141
    %v181 = vunpack.c.l.b16 %v142
    %v182 = vunpack.c.l.b16 %v143
    %v183 = vunpack.c.l.b16 %v144
    %v184 = vunpack.c.l.b16 %v145
    %v185 = vunpack.c.l.b16 %v146
    %v186 = vunpack.c.l.b16 %v147
    %v187 = vunpack.c.l.b16 %v148
    %v188 = vunpack.c.l.b16 %v149
    %v189 = vunpack.c.l.b16 %v150
    %v190 = vunpack.c.l.b16 %v151
    %v191 = vunpack.c.l.b16 %v152
    %v192 = vunpack.c.l.b16 %v153
    %v193 = vunpack.c.l.b16 %v154
    %v194 = vpack.c.b16 %v179, %v178
    %v195 = vpack.c.b16 %v181, %v180
    %v196 = vpack.c.b16 %v183, %v182
    %v197 = vpack.c.b16 %v185, %v184
    %v198 = vpack.c.b16 %v187, %v186
    %v199 = vpack.c.b16 %v189, %v188
    %v200 = vpack.c.b16 %v191, %v190
    %v201 = vpack.c.b16 %v193, %v192
    %210 = vmatprep.subr.bf16.mxu0 0
    %211 = vmatpush1.bf16.msra.mxu0 %v194
    %212 = vmatprep.subr.bf16.mxu0 0
    %213 = vmatpush1.bf16.msra.mxu0 %v195
    %214 = vmatprep.subr.bf16.mxu0 0
    %215 = vmatpush1.bf16.msra.mxu0 %v196
    %216 = vmatprep.subr.bf16.mxu0 0
    %217 = vmatpush1.bf16.msra.mxu0 %v197
    %218 = vmatprep.subr.bf16.mxu0 0
    %219 = vmatpush1.bf16.msra.mxu0 %v198
    %220 = vmatprep.subr.bf16.mxu0 0
    %221 = vmatpush1.bf16.msra.mxu0 %v199
    %222 = vmatprep.subr.bf16.mxu0 0
    %223 = vmatpush1.bf16.msra.mxu0 %v200
    %224 = vmatprep.subr.bf16.mxu0 0
    %225 = vmatpush1.bf16.msra.mxu0 %v201
    %226 = vmatprep.subr.bf16.mxu0 0
    %227 = vmatpush1.bf16.msra.mxu0 0
    %228 = vmatprep.subr.bf16.mxu0 0
    %229 = vmatpush1.bf16.msra.mxu0 0
    %230 = vmatprep.subr.bf16.mxu0 0
    %231 = vmatpush1.bf16.msra.mxu0 0
    %232 = vmatprep.subr.bf16.mxu0 0
    %233 = vmatpush1.bf16.msra.mxu0 0
    %234 = vmatprep.subr.bf16.mxu0 0
    %235 = vmatpush1.bf16.msra.mxu0 0
    %236 = vmatprep.subr.bf16.mxu0 0
    %237 = vmatpush1.bf16.msra.mxu0 0
    %238 = vmatprep.subr.bf16.mxu0 0
    %239 = vmatpush1.bf16.msra.mxu0 0
    %240 = vmatprep.subr.bf16.mxu0 0
    %241 = vmatpush1.bf16.msra.mxu0 0
    %242 = vmatprep.mubr.bf16.mxu0 0
    %243 = vmatmul.mubr.bf16.gmra.mrb[0].mxu0 %v137
    %v244 = vpop.f32.mrb[0].mxu0
    %v245 = vadd.f32 %v160, %v244
    %v246 = vpop.f32.mrb[0].mxu0
    %v247 = vpop.f32.mrb[0].mxu0
    %v248 = vadd.f32 %v160, %v247
    %v249 = vpop.f32.mrb[0].mxu0
    %250 = vmatprep.mubr.bf16.mxu0 0
    %251 = vmatmul.mubr.bf16.gmra.mrb[0].mxu0 %v138
    %v252 = vpop.f32.mrb[0].mxu0
    %v253 = vadd.f32 %v160, %v252
    %v254 = vpop.f32.mrb[0].mxu0
    %v255 = vpop.f32.mrb[0].mxu0
    %v256 = vadd.f32 %v160, %v255
    %v257 = vpop.f32.mrb[0].mxu0
    %258 = vdwg.mxu0
    %v259 = vmax.f32 %v245, 0.0
    %v260 = vmax.f32 %v248, 0.0
    %v261 = vmax.f32 %v253, 0.0
    %v262 = vmax.f32 %v256, 0.0
    %v263 = vld [vmem:[%s6] sm:$0x1]
    %v264 = vpack.c.bf16 %v260, %v259
    %v265 = vpack.c.bf16 %v262, %v261
    %v266 = vld [vmem:[%s7] sm:$0x3]
    %268 = vset.pattern.permute.xlu0 0
    %269 = vperm.xlu0 %268, %v266
    %v270 = vpop.permute.xlu0 %269
    %272 = vmatprep.subr.bf16.mxu0 0
    %273 = vmatpush1.bf16.xpose.msra.mxu0 %v264
    %274 = vmatprep.subr.bf16.mxu0 0
    %275 = vmatpush1.bf16.xpose.msra.mxu0 %v265
    %276 = vmatprep.subr.bf16.mxu0 0
    %277 = vmatpush1.bf16.xpose.msra.mxu0 0
    %278 = vmatprep.subr.bf16.mxu0 0
    %279 = vmatpush1.bf16.xpose.msra.mxu0 0
    %280 = vmatprep.subr.bf16.mxu0 0
    %281 = vmatpush1.bf16.xpose.msra.mxu0 0
    %282 = vmatprep.subr.bf16.mxu0 0
    %283 = vmatpush1.bf16.xpose.msra.mxu0 0
    %284 = vmatprep.subr.bf16.mxu0 0
    %285 = vmatpush1.bf16.xpose.msra.mxu0 0
    %286 = vmatprep.subr.bf16.mxu0 0
    %287 = vmatpush1.bf16.xpose.msra.mxu0 0
    %288 = vmatprep.subr.bf16.mxu0 0
    %289 = vmatpush1.bf16.xpose.msra.mxu0 0
    %290 = vmatprep.subr.bf16.mxu0 0
    %291 = vmatpush1.bf16.xpose.msra.mxu0 0
    %292 = vmatprep.subr.bf16.mxu0 0
    %293 = vmatpush1.bf16.xpose.msra.mxu0 0
    %294 = vmatprep.subr.bf16.mxu0 0
    %295 = vmatpush1.bf16.xpose.msra.mxu0 0
    %296 = vmatprep.subr.bf16.mxu0 0
    %297 = vmatpush1.bf16.xpose.msra.mxu0 0
    %298 = vmatprep.subr.bf16.mxu0 0
    %299 = vmatpush1.bf16.xpose.msra.mxu0 0
    %300 = vmatprep.subr.bf16.mxu0 0
    %301 = vmatpush1.bf16.xpose.msra.mxu0 0
    %302 = vmatprep.subr.bf16.mxu0 0
    %303 = vmatpush1.bf16.xpose.msra.mxu0 0
    %304 = vmatprep.mubr.bf16.mxu0 0
    %305 = vmatmul.mubr.bf16.gmra.mrb[0].mxu0 %v263
    %v306 = vpop.f32.mrb[0].mxu0
    %v307 = vadd.f32 %v270, %v306
    %v308 = vpop.f32.mrb[0].mxu0
    %v309 = vpop.f32.mrb[0].mxu0
    %v310 = vpop.f32.mrb[0].mxu0
    %311 = vdwg.mxu0
    %vm312 = vcmask 254976
    %313 = vst.msk [vmem:[#allocation2] sm:$0x3] %vm312, %v307
    // Predicated region
    $region34: #{tpu_custom_call.1} parent=1 // pred_check
      _
    $region35: #{tpu_custom_call.1} parent=1 // pred_check_branch
      %315 = sbr.rel (0) target = $region37
    $region36: #{tpu_custom_call.1} parent=1 // pred_region
      %s317 = ssub.s32 32, 32
      %318 = vsyncadd [#allocation3], %s317
      %s320 = sshll.u32 [#allocation2], 4
      %s321 = int_to_ptr.vmem [resolvable:$true] %s320
      %323 = dma.vmem_to_hbm [thread:$0]  %s321, 32, %s8, [#allocation3]
    $region37: #{tpu_custom_call.1} parent=1 // pred_fallthru
      _
    // Predicated region
    $region38: #{tpu_custom_call.1} parent=1 // pred_check
      _
    $region39: #{tpu_custom_call.1} parent=1 // pred_check_branch
      %325 = sbr.rel (0) target = $region41
    $region40: #{tpu_custom_call.1} parent=1 // pred_region
      %326 = dma.done [#allocation3], 32
    $region41: #{tpu_custom_call.1} parent=1 // pred_fallthru
      _
    %327 = vsyncpa [#allocation3], 1

</llo_original>
